<compile_context>
chip_gen: v5e
topology: v5e:2x2
jax: 0.10.0
libtpu: 0.0.40
codegen_flags: <defaults>
</compile_context>

<pallas_src>
import functools

import jax
import jax.numpy as jnp
from jax.experimental import pallas as pl
from jax.experimental.pallas import tpu as pltpu


_NEG_BIG = -1.0e30  # bias for padded vocab columns: exp underflows to 0 in f32


def _round_up(x, m):
    return ((x + m - 1) // m) * m


def _vmem_plan():
    """(vmem_limit_bytes, tile_budget_bytes); conservative default fits v7x 64 MiB."""
    phys = 64 * 1024 * 1024
    try:
        cap = int(pltpu.get_tpu_info().vmem_capacity_bytes)
        if cap > 0:
            phys = cap
    except Exception:
        pass  # fall back to the v7x-safe assumption
    vmem_limit = min(phys * 3 // 4, 96 * 1024 * 1024)
    tile_budget = vmem_limit * 5 // 6       # headroom for compiler scratch
    return vmem_limit, tile_budget


def _estimate_vmem_bytes(tm, tv, hidden, vocab_p):
    """Rough double-buffered VMEM footprint of the fused kernel."""
    x_buf = 2 * tm * hidden * 2             # bf16 activations
    w_buf = 2 * hidden * tv * 2             # bf16 weight tile
    b_buf = 2 * 8 * tv * 4                  # f32 bias tile (sublane-padded)
    o_buf = 2 * tm * vocab_p * 4            # f32 resident full-V output row block
    scratch = 2 * tm * 128 * 4              # running max / running sum
    return x_buf + w_buf + b_buf + o_buf + scratch


def _pick_tiles(m_rows, hidden, vocab_p, budget):
    tv = 128
    for c in (1024, 512, 256, 128):
        if vocab_p % c == 0:
            tv = c
            break
    tm = 8
    for c in (512, 256, 128, 64, 32, 16, 8):
        if _estimate_vmem_bytes(c, tv, hidden, vocab_p) <= budget:
            tm = c
            break
    tm = min(tm, _round_up(m_rows, 8))      # never wider than the (padded) row count
    return tm, tv


def _mlm_fused_kernel(x_ref, w_ref, b_ref, out_ref, m_sc, l_sc):
    # x_ref:   (tm, H)   bf16
    # w_ref:   (H, tv)   bf16
    # b_ref:   (1, tv)   f32
    # out_ref: (tm, Vp)  f32   -- resident across the vocab grid axis
    # m_sc/l_sc: (tm, 1) f32   -- online max / sum(exp)
    j = pl.program_id(1)
    tv = w_ref.shape[1]

    @pl.when(j == 0)
    def _():
        m_sc[...] = jnp.full_like(m_sc, -jnp.inf)
        l_sc[...] = jnp.zeros_like(l_sc)

    # bf16 MXU matmul, f32 accumulation; bias + softmax stats in f32.
    logits = jnp.dot(x_ref[...], w_ref[...],
                     preferred_element_type=jnp.float32) + b_ref[...]

    col0 = pl.multiple_of(j * tv, tv)
    out_ref[:, pl.ds(col0, tv)] = logits

    # Online max / logsumexp accumulation across vocab tiles.
    m_prev = m_sc[...]
    m_new = jnp.maximum(m_prev, jnp.max(logits, axis=-1, keepdims=True))
    l_sc[...] = (l_sc[...] * jnp.exp(m_prev - m_new)
                 + jnp.sum(jnp.exp(logits - m_new), axis=-1, keepdims=True))
    m_sc[...] = m_new

    @pl.when(j == pl.num_programs(1) - 1)
    def _():
        lse = m_sc[...] + jnp.log(l_sc[...])
        out_ref[...] = out_ref[...] - lse    # log-softmax applied in VMEM, one HBM write


def prepare_mlm_params(weight, bias):
    """One-time prep (do NOT call per step): pad vocab to a lane-friendly
    multiple and cast the weight to bf16.

    weight: (hidden, vocab) f32  (transpose of torch nn.Linear .weight)
    bias:   (vocab,)        f32
    """
    hidden, vocab = weight.shape
    pad_mult = 512 if vocab >= 512 else 128
    vocab_p = _round_up(vocab, pad_mult)
    pad = vocab_p - vocab
    w_p = jnp.pad(weight.astype(jnp.float32), ((0, 0), (0, pad))).astype(jnp.bfloat16)
    b_p = jnp.pad(bias.astype(jnp.float32), (0, pad),
                  constant_values=_NEG_BIG).reshape(1, vocab_p)
    return w_p, b_p


@functools.partial(jax.jit, static_argnames=("vocab_size",))
def masked_language_model(x, w_bf16, b_pad, vocab_size):
    """
    x:       (batch, seq, hidden) f32
    w_bf16:  (hidden, vocab_p)    bf16  (from prepare_mlm_params)
    b_pad:   (1, vocab_p)         f32   (from prepare_mlm_params)
    returns  (batch, seq, vocab_size) f32 log-probabilities
    """
    B, S, H = x.shape
    Vp = w_bf16.shape[1]
    M = B * S

    vmem_limit, budget = _vmem_plan()
    tm, tv = _pick_tiles(M, H, Vp, budget)
    Mp = _round_up(M, tm)

    x2d = x.reshape(M, H).astype(jnp.bfloat16)   # MXU inputs in bf16
    if Mp != M:
        x2d = jnp.pad(x2d, ((0, Mp - M), (0, 0)))

    grid = (Mp // tm, Vp // tv)

    cost = pl.CostEstimate(
        flops=2 * Mp * H * Vp,
        transcendentals=Mp * Vp,
        bytes_accessed=(Mp * H * 2                 # activations, streamed once
                        + grid[0] * H * Vp * 2     # weight re-streamed per M tile
                        + grid[0] * Vp * 4         # bias re-streamed per M tile
                        + Mp * Vp * 4),            # fused log-probs, written once
    )

    out = pl.pallas_call(
        _mlm_fused_kernel,
        out_shape=jax.ShapeDtypeStruct((Mp, Vp), jnp.float32),
        grid_spec=pltpu.PrefetchScalarGridSpec(
            num_scalar_prefetch=0,
            grid=grid,
            in_specs=[
                pl.BlockSpec((tm, H), lambda i, j: (i, 0)),
                pl.BlockSpec((H, tv), lambda i, j: (0, j)),
                pl.BlockSpec((1, tv), lambda i, j: (0, j)),
            ],
            # Full-vocab row block, resident across the j (vocab) axis.
            out_specs=pl.BlockSpec((tm, Vp), lambda i, j: (i, 0)),
            scratch_shapes=[
                pltpu.VMEM((tm, 1), jnp.float32),   # running max
                pltpu.VMEM((tm, 1), jnp.float32),   # running sum(exp)
            ],
        ),
        compiler_params=pltpu.CompilerParams(
            dimension_semantics=("parallel", "arbitrary"),
            vmem_limit_bytes=vmem_limit,
        ),
        cost_estimate=cost,
    )(x2d, w_bf16, b_pad)

    return out[:M, :vocab_size].reshape(B, S, vocab_size)


if __name__ == "__main__":
    # Small shapes consistent with the module: BERT hidden states in,
    # vocab-sized log-probabilities out.
    batch, seq, hidden, vocab = 2, 8, 32, 128

    key = jax.random.PRNGKey(0)
    kx, kw, kb = jax.random.split(key, 3)

    x = jax.random.normal(kx, (batch, seq, hidden), dtype=jnp.float32)

    # Deterministic nn.Linear-style init: U(-1/sqrt(hidden), 1/sqrt(hidden)).
    bound = 1.0 / (hidden ** 0.5)
    # stored as (hidden, vocab), i.e. the transpose of torch's (vocab, hidden)
    weight = jax.random.uniform(kw, (hidden, vocab), jnp.float32,
                                minval=-bound, maxval=bound)
    bias = jax.random.uniform(kb, (vocab,), jnp.float32,
                              minval=-bound, maxval=bound)

    # One-time parameter prep (padding + bf16 cast hoisted out of the hot path).
    w_bf16, b_pad = prepare_mlm_params(weight, bias)

    out = masked_language_model(x, w_bf16, b_pad, vocab)
    out = jax.block_until_ready(out)
    assert out.shape == (batch, seq, vocab)

    # Reference with the same bf16 MXU inputs / f32 accumulation as the kernel.
    logits_ref = jnp.dot(x.reshape(-1, hidden).astype(jnp.bfloat16),
                         weight.astype(jnp.bfloat16),
                         preferred_element_type=jnp.float32) + bias
    ref_bf16 = jax.nn.log_softmax(logits_ref, axis=-1).reshape(batch, seq, vocab)
    assert jnp.allclose(out, ref_bf16, atol=1e-4, rtol=1e-4), \
        "mismatch vs bf16-matmul reference"

    # Loose check vs the full-f32 PyTorch-semantics reference.
    # TODO(synk): bf16 MXU inputs are an intentional precision contract vs torch f32 Linear.
    ref_f32 = jax.nn.log_softmax(x @ weight + bias, axis=-1)
    assert jnp.allclose(out, ref_f32, atol=5e-2), "mismatch vs f32 reference"

    print("KERNEL_OK")
</pallas_src>

<mosaic_0001>
module attributes {stable_mosaic.version = 11 : i64} {
  func.func @_mlm_fused_kernel(%arg0: i32, %arg1: i32, %arg2: memref<16x32xbf16, #tpu.memory_space<vmem>>, %arg3: memref<32x128xbf16, #tpu.memory_space<vmem>>, %arg4: memref<1x128xf32, #tpu.memory_space<vmem>>, %arg5: memref<16x128xf32, #tpu.memory_space<vmem>>, %arg6: memref<16x1xf32, #tpu.memory_space<vmem>>, %arg7: memref<16x1xf32, #tpu.memory_space<vmem>>) attributes {dimension_semantics = [#tpu.dimension_semantics<parallel>, #tpu.dimension_semantics<arbitrary>], iteration_bounds = array<i64: 1, 1>, scalar_prefetch = 0 : i64, scratch_operands = 2 : i64, tpu.core_type = #tpu.core_type<tc>, window_params = [{transform_indices = @transform_0, window_bounds = array<i64: 16, 32>}, {transform_indices = @transform_1, window_bounds = array<i64: 32, 128>}, {transform_indices = @transform_2, window_bounds = array<i64: 1, 128>}, {transform_indices = @transform_3, window_bounds = array<i64: 16, 128>}]} {
    %c0_i32 = arith.constant 0 : i32
    %0 = arith.cmpi eq, %arg1, %c0_i32 : i32
    %1 = arith.extui %0 : i1 to i32
    %c0_i32_0 = arith.constant 0 : i32
    %2 = arith.cmpi ne, %1, %c0_i32_0 : i32
    scf.if %2 {
      %cst_19 = arith.constant 0xFF800000 : f32
      %32 = vector.broadcast %cst_19 : f32 to vector<16x1xf32>
      %c0_20 = arith.constant 0 : index
      %c0_21 = arith.constant 0 : index
      %33 = vector.load %arg6[%c0_20, %c0_21] : memref<16x1xf32, #tpu.memory_space<vmem>>, vector<16x1xf32>
      tpu.vector_store %arg6[%c0_20, %c0_21], %32 {strides = array<i32>} : memref<16x1xf32, #tpu.memory_space<vmem>>, vector<16x1xf32>,
      %cst_22 = arith.constant 0.000000e+00 : f32
      %34 = vector.broadcast %cst_22 : f32 to vector<16x1xf32>
      %c0_23 = arith.constant 0 : index
      %c0_24 = arith.constant 0 : index
      %35 = vector.load %arg7[%c0_23, %c0_24] : memref<16x1xf32, #tpu.memory_space<vmem>>, vector<16x1xf32>
      tpu.vector_store %arg7[%c0_23, %c0_24], %34 {strides = array<i32>} : memref<16x1xf32, #tpu.memory_space<vmem>>, vector<16x1xf32>,
    } else {
    }
    %c0 = arith.constant 0 : index
    %c0_1 = arith.constant 0 : index
    %3 = vector.load %arg2[%c0, %c0_1] : memref<16x32xbf16, #tpu.memory_space<vmem>>, vector<16x32xbf16>
    %c0_2 = arith.constant 0 : index
    %c0_3 = arith.constant 0 : index
    %4 = vector.load %arg3[%c0_2, %c0_3] : memref<32x128xbf16, #tpu.memory_space<vmem>>, vector<32x128xbf16>
    %cst = arith.constant dense<0.000000e+00> : vector<16x128xf32>
    %5 = tpu.matmul %3, %4, %cst {dimension_numbers = #tpu.dot_dimension_numbers<[1], [0], [0], [1], [0, 0, 1, 1], [], []>} : vector<16x32xbf16>, vector<32x128xbf16>, vector<16x128xf32> -> vector<16x128xf32>
    %c0_4 = arith.constant 0 : index
    %c0_5 = arith.constant 0 : index
    %6 = vector.load %arg4[%c0_4, %c0_5] : memref<1x128xf32, #tpu.memory_space<vmem>>, vector<1x128xf32>
    %7 = vector.broadcast %6 : vector<1x128xf32> to vector<16x128xf32>
    %8 = arith.addf %5, %7 : vector<16x128xf32>
    %c128_i32 = arith.constant 128 : i32
    %9 = arith.muli %arg1, %c128_i32 : i32
    %10 = tpu.assume_multiple %9, 128 : i32
    %c0_6 = arith.constant 0 : index
    %11 = arith.index_cast %10 : i32 to index
    %12 = vector.load %arg5[%c0_6, %11] : memref<16x128xf32, #tpu.memory_space<vmem>>, vector<16x128xf32>
    tpu.vector_store %arg5[%c0_6, %11], %8 {strides = array<i32>} : memref<16x128xf32, #tpu.memory_space<vmem>>, vector<16x128xf32>,
    %c0_7 = arith.constant 0 : index
    %c0_8 = arith.constant 0 : index
    %13 = vector.load %arg6[%c0_7, %c0_8] : memref<16x1xf32, #tpu.memory_space<vmem>>, vector<16x1xf32>
    %cst_9 = arith.constant dense<0xFF800000> : vector<16xf32>
    %14 = vector.multi_reduction <maximumf>, %8, %cst_9 [1] : vector<16x128xf32> to vector<16xf32>
    %15 = vector.shape_cast %14 : vector<16xf32> to vector<16x1xf32>
    %16 = arith.maximumf %13, %15 : vector<16x1xf32>
    %c0_10 = arith.constant 0 : index
    %c0_11 = arith.constant 0 : index
    %17 = vector.load %arg7[%c0_10, %c0_11] : memref<16x1xf32, #tpu.memory_space<vmem>>, vector<16x1xf32>
    %18 = arith.subf %13, %16 : vector<16x1xf32>
    %19 = math.exp %18 : vector<16x1xf32>
    %20 = arith.mulf %17, %19 : vector<16x1xf32>
    %21 = vector.broadcast %16 : vector<16x1xf32> to vector<16x128xf32>
    %22 = arith.subf %8, %21 : vector<16x128xf32>
    %23 = math.exp %22 : vector<16x128xf32>
    %cst_12 = arith.constant dense<0.000000e+00> : vector<16xf32>
    %24 = vector.multi_reduction <add>, %23, %cst_12 [1] : vector<16x128xf32> to vector<16xf32>
    %25 = vector.shape_cast %24 : vector<16xf32> to vector<16x1xf32>
    %26 = arith.addf %20, %25 : vector<16x1xf32>
    %c0_13 = arith.constant 0 : index
    %c0_14 = arith.constant 0 : index
    %27 = vector.load %arg7[%c0_13, %c0_14] : memref<16x1xf32, #tpu.memory_space<vmem>>, vector<16x1xf32>
    tpu.vector_store %arg7[%c0_13, %c0_14], %26 {strides = array<i32>} : memref<16x1xf32, #tpu.memory_space<vmem>>, vector<16x1xf32>,
    %c0_15 = arith.constant 0 : index
    %c0_16 = arith.constant 0 : index
    %28 = vector.load %arg6[%c0_15, %c0_16] : memref<16x1xf32, #tpu.memory_space<vmem>>, vector<16x1xf32>
    tpu.vector_store %arg6[%c0_15, %c0_16], %16 {strides = array<i32>} : memref<16x1xf32, #tpu.memory_space<vmem>>, vector<16x1xf32>,
    %c0_i32_17 = arith.constant 0 : i32
    %29 = arith.cmpi eq, %arg1, %c0_i32_17 : i32
    %30 = arith.extui %29 : i1 to i32
    %c0_i32_18 = arith.constant 0 : i32
    %31 = arith.cmpi ne, %30, %c0_i32_18 : i32
    scf.if %31 {
      %c0_19 = arith.constant 0 : index
      %c0_20 = arith.constant 0 : index
      %32 = vector.load %arg6[%c0_19, %c0_20] : memref<16x1xf32, #tpu.memory_space<vmem>>, vector<16x1xf32>
      %c0_21 = arith.constant 0 : index
      %c0_22 = arith.constant 0 : index
      %33 = vector.load %arg7[%c0_21, %c0_22] : memref<16x1xf32, #tpu.memory_space<vmem>>, vector<16x1xf32>
      %34 = math.log %33 : vector<16x1xf32>
      %35 = arith.addf %32, %34 : vector<16x1xf32>
      %c0_23 = arith.constant 0 : index
      %c0_24 = arith.constant 0 : index
      %36 = vector.load %arg5[%c0_23, %c0_24] : memref<16x128xf32, #tpu.memory_space<vmem>>, vector<16x128xf32>
      %37 = vector.broadcast %35 : vector<16x1xf32> to vector<16x128xf32>
      %38 = arith.subf %36, %37 : vector<16x128xf32>
      %c0_25 = arith.constant 0 : index
      %c0_26 = arith.constant 0 : index
      %39 = vector.load %arg5[%c0_25, %c0_26] : memref<16x128xf32, #tpu.memory_space<vmem>>, vector<16x128xf32>
      tpu.vector_store %arg5[%c0_25, %c0_26], %38 {strides = array<i32>} : memref<16x128xf32, #tpu.memory_space<vmem>>, vector<16x128xf32>,
    } else {
    }
    return
  }
  func.func @transform_0(%arg0: i32, %arg1: i32) -> (i32, i32) {
    %c0_i32 = arith.constant 0 : i32
    %c0_i32_0 = arith.constant 0 : i32
    return %arg0, %c0_i32 : i32, i32
  }
  func.func @transform_1(%arg0: i32, %arg1: i32) -> (i32, i32) {
    %c0_i32 = arith.constant 0 : i32
    %c0_i32_0 = arith.constant 0 : i32
    return %c0_i32, %arg1 : i32, i32
  }
  func.func @transform_2(%arg0: i32, %arg1: i32) -> (i32, i32) {
    %c0_i32 = arith.constant 0 : i32
    %c0_i32_0 = arith.constant 0 : i32
    return %c0_i32, %arg1 : i32, i32
  }
  func.func @transform_3(%arg0: i32, %arg1: i32) -> (i32, i32) {
    %c0_i32 = arith.constant 0 : i32
    %c0_i32_0 = arith.constant 0 : i32
    return %arg0, %c0_i32 : i32, i32
  }
}

</mosaic_0001>

<llo_original>
// kernel: masked_language_model.1
$region0: #{masked_language_model.1}
  #allocation0 [shape = 'u32[]', space=smem, size = 0x4, offset = 0x4, fixed_abs, tag = 'smem constant byte address 0x4 - core index']
  #allocation1 [shape = 'u32[72,128]{1,0:T(1,128)}', space=vmem, size = 0x9000, scoped, tag = 'internal scratch']
  #allocation2 [shape = 'f32[16,1]{1,0:T(8,128)}', space=vmem, size = 0x2000, scoped, tag = 'scratch operand']
  #allocation3 [shape = 'f32[16,1]{1,0:T(8,128)}', space=vmem, size = 0x2000, scoped, tag = 'scratch operand']
  %s0 = inlined_call_operand.vmem [shape: bf16[16,32], index: 0, kind: input, shape index: {}]
  %s1 = inlined_call_operand.vmem [shape: bf16[32,128], index: 1, kind: input, shape index: {}]
  %s2 = inlined_call_operand.vmem [shape: f32[1,128], index: 2, kind: input, shape index: {}]
  %s3 = inlined_call_operand.hbm [shape: f32[16,128], index: 3, kind: output, shape index: {}]
  %s4 = sld [smem:[#allocation0]]
  $region30: #{masked_language_model.1} parent=0
    _
  %s6 = ssub.s32 1, %s4
  %s7 = scalar_select 0, %s6, %s4
  $region1: #{masked_language_model.1} parent=0
    #allocation4 [shape = 'u8[8192]{0}', space=vmem, size = 0x2000, scoped, tag = 'output window, operand 0, single buffered']
    #allocation5 [shape = 's32[1]{0}', space=sflag, size = 0x4, scoped, tag = 'scoped memory for masked_language_model.1']
    %8 = vsyncpa [#allocation5], 0
    // Predicated region
    $region2: #{masked_language_model.1} parent=1 // pred_check
      _
    $region3: #{masked_language_model.1} parent=1 // pred_check_branch
      %10 = sbr.rel (0) target = $region5
    $region4: #{masked_language_model.1} parent=1 // pred_region
      _
    $region5: #{masked_language_model.1} parent=1 // pred_fallthru
      _
    // Predicated region
    $region6: #{masked_language_model.1} parent=1 // pred_check
      _
    $region7: #{masked_language_model.1} parent=1 // pred_check_branch
      %12 = sbr.rel (0) target = $region9
    $region8: #{masked_language_model.1} parent=1 // pred_region
      _
    $region9: #{masked_language_model.1} parent=1 // pred_fallthru
      _
    // Predicated region
    $region10: #{masked_language_model.1} parent=1 // pred_check
      _
    $region11: #{masked_language_model.1} parent=1 // pred_check_branch
      %14 = sbr.rel (0) target = $region13
    $region12: #{masked_language_model.1} parent=1 // pred_region
      _
    $region13: #{masked_language_model.1} parent=1 // pred_fallthru
      _
    %p16 = scmp.eq.s32.totalorder 0, 0
    // Predicated region
    $region14: #{masked_language_model.1} parent=1 // pred_check
      %p17 = pneg %p16
    $region15: #{masked_language_model.1} parent=1 // pred_check_branch
      %19 = sbr.rel (%p17) target = $region17
    $region16: #{masked_language_model.1} parent=1 // pred_region
      %vm20 = vcmask 7168
      %21 = vst.msk [vmem:[#allocation2] sm:$0xff] %vm20, -inf
      %22 = vst.msk [vmem:[#allocation2 + $0x8] sm:$0xff] %vm20, -inf
      %23 = vst.msk [vmem:[#allocation3] sm:$0xff] %vm20, 0.0
      %24 = vst.msk [vmem:[#allocation3 + $0x8] sm:$0xff] %vm20, 0.0
    $region17: #{masked_language_model.1} parent=1 // pred_fallthru
      _
    %v25 = vld [vmem:[%s0] sm:$0xf]
    %v26 = vld [vmem:[%s0 + $0x4] sm:$0xf]
    %v27 = vld [vmem:[%s1] sm:$0xf]
    %v28 = vld [vmem:[%s1 + $0x4] sm:$0xf]
    %v29 = vld [vmem:[%s1 + $0x8] sm:$0xf]
    %v30 = vld [vmem:[%s1 + $0xc] sm:$0xf]
    %v31 = vld [vmem:[%s2] sm:$0x1]
    %v33 = vperm.slane %v31, 0
    %v37 = vunpack.c.l.b16 %v25
    %v38 = vunpack.c.l.b16 %v26
    %v39 = vpack.c.b16 %v38, %v37
    %v44 = vunpack.c.l.b16 %v27
    %v45 = vunpack.c.l.b16 %v28
    %v46 = vunpack.c.l.b16 %v29
    %v47 = vunpack.c.l.b16 %v30
    %v48 = vpack.c.b16 %v45, %v44
    %v49 = vpack.c.b16 %v47, %v46
    %vm52 = vcmask 261120
    %v54 = vsel %vm52, %v39, 0
    %56 = vmatpush.bf16.msra.mxu0 0
    %57 = vmatpush.bf16.msra.mxu0 0
    %58 = vmatpush.bf16.msra.mxu0 0
    %59 = vmatpush.bf16.msra.mxu0 0
    %60 = vmatpush.bf16.msra.mxu0 0
    %61 = vmatpush.bf16.msra.mxu0 0
    %62 = vmatpush.bf16.msra.mxu0 %v49
    %63 = vmatpush.bf16.msra.mxu0 %v48
    %64 = vmatmul.bf16.gmra.mxu0 %v54
    %v65 = vpop.f32.mrf.mxu0
    %v66 = vadd.f32 %v33, %v65
    %v67 = vpop.f32.mrf.mxu0
    %v68 = vadd.f32 %v33, %v67
    %69 = vdwg.mxu0
    %s70 = smul.u32 0, 128
    %s71 = sshra.s32 %s70, 7
    %s72 = sand.u32 %s70, 127
    %s73 = scalar_lea.vmem [#allocation4], %s71
    %74 = vst [vmem:[%s73] sm:$0xff] %v66
    %75 = vst [vmem:[%s73 + $0x8] sm:$0xff] %v68
    %v76 = vld [vmem:[#allocation2] sm:$0xff]
    %v77 = vld [vmem:[#allocation2 + $0x8] sm:$0xff]
    %78 = vmax.xlane.f32.xlu0 %v66
    %v79 = vpop.xlane.xlu0 %78
    %80 = vmax.xlane.f32.xlu0 %v68
    %v81 = vpop.xlane.xlu0 %80
    %v82 = vmax.f32 %v76, %v79
    %v83 = vmax.f32 %v77, %v81
    %v84 = vld [vmem:[#allocation3] sm:$0xff]
    %v85 = vld [vmem:[#allocation3 + $0x8] sm:$0xff]
    %v86 = vsub.f32 %v76, %v82
    %v87 = vsub.f32 %v77, %v83
    %v88 = vmul.f32 %v86, 1.442695
    %v89 = vpow.pop %v88
    %v90 = vmul.f32 %v87, 1.442695
    %v91 = vpow.pop %v90
    %v92 = vmul.f32 %v84, %v89
    %v93 = vmul.f32 %v85, %v91
    %95 = vset.pattern.permute.xlu0 0
    %96 = vperm.xlu0 %95, %v82
    %v97 = vpop.permute.xlu0 %96
    %100 = vset.pattern.permute.xlu0 0
    %101 = vperm.xlu0 %100, %v83
    %v102 = vpop.permute.xlu0 %101
    %v104 = vsub.f32 %v66, %v97
    %v105 = vsub.f32 %v68, %v102
    %v106 = vmul.f32 %v104, 1.442695
    %v107 = vpow.pop %v106
    %v108 = vmul.f32 %v105, 1.442695
    %v109 = vpow.pop %v108
    %110 = vadd.xlane.f32.xlu0 %v107
    %v111 = vpop.xlane.xlu0 %110
    %112 = vadd.xlane.f32.xlu0 %v109
    %v113 = vpop.xlane.xlu0 %112
    %v114 = vadd.f32 %v92, %v111
    %v115 = vadd.f32 %v93, %v113
    %vm116 = vcmask 7168
    %117 = vst.msk [vmem:[#allocation3] sm:$0xff] %vm116, %v114
    %118 = vst.msk [vmem:[#allocation3 + $0x8] sm:$0xff] %vm116, %v115
    %119 = vst.msk [vmem:[#allocation2] sm:$0xff] %vm116, %v82
    %120 = vst.msk [vmem:[#allocation2 + $0x8] sm:$0xff] %vm116, %v83
    // Predicated region
    $region18: #{masked_language_model.1} parent=1 // pred_check
      %p121 = pneg %p16
    $region19: #{masked_language_model.1} parent=1 // pred_check_branch
      %123 = sbr.rel (%p121) target = $region21
    $region20: #{masked_language_model.1} parent=1 // pred_region
      %v124 = vld [vmem:[#allocation2] sm:$0xff]
      %v125 = vld [vmem:[#allocation2 + $0x8] sm:$0xff]
      %v126 = vld [vmem:[#allocation3] sm:$0xff]
      %v127 = vld [vmem:[#allocation3 + $0x8] sm:$0xff]
      %v128 = vlog2.pop %v126
      %v129 = vmul.f32 %v128, 0.6931472
      %v130 = vlog2.pop %v127
      %v131 = vmul.f32 %v130, 0.6931472
      %v132 = vadd.f32 %v124, %v129
      %v133 = vadd.f32 %v125, %v131
      %v134 = vld [vmem:[#allocation4] sm:$0xff]
      %v135 = vld [vmem:[#allocation4 + $0x8] sm:$0xff]
      %137 = vset.pattern.permute.xlu0 0
      %138 = vperm.xlu0 %137, %v132
      %v139 = vpop.permute.xlu0 %138
      %142 = vset.pattern.permute.xlu0 0
      %143 = vperm.xlu0 %142, %v133
      %v144 = vpop.permute.xlu0 %143
      %v146 = vsub.f32 %v134, %v139
      %v147 = vsub.f32 %v135, %v144
      %148 = vst [vmem:[#allocation4] sm:$0xff] %v146
      %149 = vst [vmem:[#allocation4 + $0x8] sm:$0xff] %v147
    $region21: #{masked_language_model.1} parent=1 // pred_fallthru
      _
    // Predicated region
    $region22: #{masked_language_model.1} parent=1 // pred_check
      _
    $region23: #{masked_language_model.1} parent=1 // pred_check_branch
      %151 = sbr.rel (0) target = $region25
    $region24: #{masked_language_model.1} parent=1 // pred_region
      %153 = vsyncadd [#allocation5], 0
      %s154 = sshll.u32 [#allocation4], 4
      %s155 = int_to_ptr.vmem [resolvable:$true] %s154
      %s156 = sshll.u32 %s3, 4
      %s157 = int_to_ptr.hbm [resolvable:$true] %s156
      %162 = dma.vmem_to_hbm [thread:$0]  %s155, 256, %s157, [#allocation5], 128, 128, 8
    $region25: #{masked_language_model.1} parent=1 // pred_fallthru
      _
    // Predicated region
    $region26: #{masked_language_model.1} parent=1 // pred_check
      _
    $region27: #{masked_language_model.1} parent=1 // pred_check_branch
      %164 = sbr.rel (0) target = $region29
    $region28: #{masked_language_model.1} parent=1 // pred_region
      %166 = dma.done [#allocation5], 256
    $region29: #{masked_language_model.1} parent=1 // pred_fallthru
      _
    %167 = vsyncpa [#allocation5], 1

</llo_original>
